<compile_context>
chip_gen: v5e
topology: v5e:2x2
jax: 0.10.0
libtpu: 0.0.40
codegen_flags: <defaults>
</compile_context>

<pallas_src>
import functools
import math

import numpy as np
import jax
import jax.numpy as jnp
from jax import lax
from jax.experimental import pallas as pl
from jax.experimental.pallas import tpu as pltpu  # noqa: F401  (TPU backend)

HIDDEN = 32
HEADS = 8
SEQ = 64     # must be divisible by HEADS (required by the module's .view())
BATCH = 2


# ------------------------------ fused kernel --------------------------------

def _fused_attention_kernel(x_ref, wb_ref, c_ref, out_ref, att_ref,
                            *, n, f, sp, scale):
    """Single fused forward pass; everything resident in VMEM, no grid.

    x_ref:   (3n, f)       rows [q; k; v], each in the original (seq, batch)
                           flattening (row m = s*B + b, s = i*heads + h).
    wb_ref:  (4f + 4, f)   rows [Wq; Wk; Wv; Wfc; bq; bk; bv; bfc]
                           (nn.Linear layout: y = x @ W.T + b).
    c_ref:   (2n + sp, n)  rows [additive group mask; output row permutation;
                           attention-weight row selector] (compile-time consts).
    out_ref: (n, f)        rows in the module's output (S', B) flattening.
    att_ref: (sp, n)       att_ref[i, (j*heads + h)*B + b] = att[b, h, i, j]
                           (lane-dense; reshaped/transposed in the wrapper).
    """
    f32 = jnp.float32

    # ---- hoisted compile-time constants (static sublane slices, no compute) -
    mask_add = c_ref[0:n, :]               # (n, n)  0 in-group / -1e30 off-group
    p_final = c_ref[n:2 * n, :]            # (n, n)  composed output permutation
    c_sel = c_ref[2 * n:2 * n + sp, :]     # (sp, n) attention-weight selector

    # ---- consolidated runtime operands --------------------------------------
    q = x_ref[0:n, :]
    k = x_ref[n:2 * n, :]
    v = x_ref[2 * n:3 * n, :]

    wq = wb_ref[0 * f:1 * f, :]
    wk = wb_ref[1 * f:2 * f, :]
    wv = wb_ref[2 * f:3 * f, :]
    wfc = wb_ref[3 * f:4 * f, :]
    bq = wb_ref[4 * f + 0:4 * f + 1, :]
    bk = wb_ref[4 * f + 1:4 * f + 2, :]
    bv = wb_ref[4 * f + 2:4 * f + 3, :]
    bfc = wb_ref[4 * f + 3:4 * f + 4, :]

    def project(x, w, b):                  # y = x @ W.T + b
        return lax.dot_general(x, w, (((1,), (1,)), ((), ())),
                               preferred_element_type=f32) + b

    # Q/K/V projections in the ORIGINAL row order (no input permutations).
    qp = project(q, wq, bq) * scale        # scale on (n, f), not the (n, n) energy
    kp = project(k, wk, bk)
    vp = project(v, wv, bv)

    # ---- block attention over all batch*heads groups in one (n, n) matmul ---
    energy = lax.dot_general(qp, kp, (((1,), (1,)), ((), ())),
                             preferred_element_type=f32) + mask_add
    e_max = jnp.max(energy, axis=-1, keepdims=True)
    e = jnp.exp(energy - e_max)            # off-group entries underflow to exact 0
    denom = jnp.sum(e, axis=-1, keepdims=True)
    att = e * pl.reciprocal(denom)         # exact reciprocal (keeps 2e-4 tolerance)
    # TODO(synk): nn.Dropout(p=0.5) on `att` is identity in eval mode; a
    # train-mode version would need pltpu.prng_seed / pltpu.prng_random_bits.
    # TODO(synk): the optional `mask` argument of the module is not implemented
    # (forward is exercised with mask=None).

    ctx = jnp.dot(att, vp, preferred_element_type=f32)            # (n, f)

    # ---- output projection + single composed row permutation ----------------
    out_orig = lax.dot_general(ctx, wfc, (((1,), (1,)), ((), ())),
                               preferred_element_type=f32) + bfc
    out_ref[...] = jnp.dot(p_final, out_orig,
                           preferred_element_type=f32).astype(out_ref.dtype)

    # ---- lane-dense attention weights: (sp, n) selector matmul --------------
    # Off-group entries of `att` are exactly zero, so summing the rows sharing a
    # within-group index picks out each group's value.
    att_ref[...] = jnp.dot(c_sel, att,
                           preferred_element_type=f32).astype(att_ref.dtype)


# ------------------------------- forward glue --------------------------------

def _build_constants(S, B, heads):
    """Compile-time constant matrices (numpy; embedded as constants under jit)."""
    sp = S // heads
    n = S * B
    groups = B * heads

    m = np.arange(n)
    # Original row m = s*B + b with s = i*heads + h.
    g_of_m = (m % B) * heads + (m // B) % heads        # group = b*heads + h
    i_of_m = m // groups                               # within-group (query) idx

    # 0 / -1e30 additive mask: rows attend only within their (b, h) group.
    mask_add = np.where(g_of_m[:, None] == g_of_m[None, :],
                        np.float32(0.0), np.float32(-1e30)).astype(np.float32)

    # Output row r = i*B*heads + b*heads + h  <-  original row (i*heads + h)*B + b.
    r = np.arange(n)
    src = ((r // groups) * heads + (r % heads)) * B + ((r % groups) // heads)
    p_final = (m[None, :] == src[:, None]).astype(np.float32)     # (n, n)

    # att selector: att_T[i, m'] = att[(row with index i in group of m'), m'].
    c_sel = (np.arange(sp)[:, None] == i_of_m[None, :]).astype(np.float32)

    return np.concatenate([mask_add, p_final, c_sel], axis=0)     # (2n + sp, n)


def attention_forward(params, q, k, v):
    S, B, F = q.shape
    heads = HEADS
    head_dim = F // heads
    assert heads * head_dim == F, "feature dimension is not divisible by heads"
    assert S % heads == 0, "seq length must be divisible by heads (module .view)"
    sp = S // heads
    n = S * B
    scale = 1.0 / math.sqrt(head_dim)

    consts = jnp.asarray(_build_constants(S, B, heads))            # (2n + sp, n)

    # Consolidated operands: 3 input DMAs total (q|k|v, weights|biases, consts).
    x_all = jnp.concatenate(
        [q.reshape(n, F), k.reshape(n, F), v.reshape(n, F)], axis=0)
    wb_all = jnp.concatenate(
        [params['wq_w'], params['wk_w'], params['wv_w'], params['fc_w'],
         params['wq_b'].reshape(1, F), params['wk_b'].reshape(1, F),
         params['wv_b'].reshape(1, F), params['fc_b'].reshape(1, F)], axis=0)

    kernel = functools.partial(_fused_attention_kernel,
                               n=n, f=F, sp=sp, scale=scale)

    out2d, att_t = pl.pallas_call(
        kernel,
        out_shape=(
            jax.ShapeDtypeStruct((n, F), q.dtype),
            jax.ShapeDtypeStruct((sp, n), q.dtype),
        ),
    )(x_all, wb_all, consts)

    out = out2d.reshape(S, B, F)
    # att_t[i, (j*heads + h)*B + b] == att[b, h, i, j]
    att_heads = att_t.reshape(sp, sp, heads, B).transpose(3, 2, 0, 1)
    return out, att_heads


# ------------------------------ reference (jnp) ------------------------------

def reference_forward(params, q, k, v):
    def lin(x, w, b):
        return jnp.einsum('sbf,of->sbo', x, w) + b
    qp = lin(q, params['wq_w'], params['wq_b'])
    kp = lin(k, params['wk_w'], params['wk_b'])
    vp = lin(v, params['wv_w'], params['wv_b'])
    S, B, F = q.shape
    heads = HEADS
    head_dim = F // heads
    sp = S // heads
    qh = jnp.transpose(jnp.transpose(qp, (1, 0, 2)).reshape(B, sp, heads, F), (0, 2, 1, 3))
    kh = jnp.transpose(jnp.transpose(kp, (1, 0, 2)).reshape(B, sp, heads, F), (0, 2, 3, 1))
    vh = jnp.transpose(jnp.transpose(vp, (1, 0, 2)).reshape(B, sp, heads, F), (0, 2, 1, 3))
    energy = jnp.matmul(qh, kh) / math.sqrt(head_dim)
    att = jax.nn.softmax(energy, axis=-1)
    v_att = jnp.matmul(att, vh)
    v_att = jnp.transpose(v_att, (2, 0, 1, 3)).reshape(-1, B, F)
    out = jnp.einsum('sbf,of->sbo', v_att, params['fc_w']) + params['fc_b']
    return out, att


# ----------------------------------- main ------------------------------------

def init_params(key, hidden):
    keys = jax.random.split(key, 8)
    bound = 1.0 / math.sqrt(hidden)

    def u(kk, shape):
        return jax.random.uniform(kk, shape, jnp.float32, -bound, bound)

    return {
        'wq_w': u(keys[0], (hidden, hidden)), 'wq_b': u(keys[1], (hidden,)),
        'wk_w': u(keys[2], (hidden, hidden)), 'wk_b': u(keys[3], (hidden,)),
        'wv_w': u(keys[4], (hidden, hidden)), 'wv_b': u(keys[5], (hidden,)),
        'fc_w': u(keys[6], (hidden, hidden)), 'fc_b': u(keys[7], (hidden,)),
    }


if __name__ == "__main__":
    key = jax.random.PRNGKey(0)
    kparam, kq, kk, kv = jax.random.split(key, 4)
    params = init_params(kparam, HIDDEN)

    q = jax.random.normal(kq, (SEQ, BATCH, HIDDEN), jnp.float32)
    k = jax.random.normal(kk, (SEQ, BATCH, HIDDEN), jnp.float32)
    v = jax.random.normal(kv, (SEQ, BATCH, HIDDEN), jnp.float32)

    fwd = jax.jit(attention_forward)
    out, att = fwd(params, q, k, v)
    out = jax.block_until_ready(out)
    att = jax.block_until_ready(att)

    ref_out, ref_att = reference_forward(params, q, k, v)
    assert out.shape == (SEQ, BATCH, HIDDEN)
    assert att.shape == (BATCH, HEADS, SEQ // HEADS, SEQ // HEADS)
    assert jnp.allclose(out, ref_out, atol=2e-4, rtol=2e-4), \
        float(jnp.max(jnp.abs(out - ref_out)))
    assert jnp.allclose(att, ref_att, atol=2e-4, rtol=2e-4), \
        float(jnp.max(jnp.abs(att - ref_att)))

    print("KERNEL_OK")
</pallas_src>

<mosaic_0001>
module attributes {stable_mosaic.version = 11 : i64} {
  func.func @_fused_attention_kernel(%arg0: memref<384x32xf32, #tpu.memory_space<vmem>>, %arg1: memref<132x32xf32, #tpu.memory_space<vmem>>, %arg2: memref<264x128xf32, #tpu.memory_space<vmem>>, %arg3: memref<128x32xf32, #tpu.memory_space<vmem>>, %arg4: memref<8x128xf32, #tpu.memory_space<vmem>>) attributes {dimension_semantics = [], scalar_prefetch = 0 : i64, scratch_operands = 0 : i64, tpu.core_type = #tpu.core_type<tc>} {
    %c0 = arith.constant 0 : index
    %c0_0 = arith.constant 0 : index
    %0 = vector.load %arg2[%c0, %c0_0] : memref<264x128xf32, #tpu.memory_space<vmem>>, vector<128x128xf32>
    %c128 = arith.constant 128 : index
    %c0_1 = arith.constant 0 : index
    %1 = vector.load %arg2[%c128, %c0_1] : memref<264x128xf32, #tpu.memory_space<vmem>>, vector<128x128xf32>
    %c256 = arith.constant 256 : index
    %c0_2 = arith.constant 0 : index
    %2 = vector.load %arg2[%c256, %c0_2] : memref<264x128xf32, #tpu.memory_space<vmem>>, vector<8x128xf32>
    %c0_3 = arith.constant 0 : index
    %c0_4 = arith.constant 0 : index
    %3 = vector.load %arg0[%c0_3, %c0_4] : memref<384x32xf32, #tpu.memory_space<vmem>>, vector<128x32xf32>
    %c128_5 = arith.constant 128 : index
    %c0_6 = arith.constant 0 : index
    %4 = vector.load %arg0[%c128_5, %c0_6] : memref<384x32xf32, #tpu.memory_space<vmem>>, vector<128x32xf32>
    %c256_7 = arith.constant 256 : index
    %c0_8 = arith.constant 0 : index
    %5 = vector.load %arg0[%c256_7, %c0_8] : memref<384x32xf32, #tpu.memory_space<vmem>>, vector<128x32xf32>
    %c0_9 = arith.constant 0 : index
    %c0_10 = arith.constant 0 : index
    %6 = vector.load %arg1[%c0_9, %c0_10] : memref<132x32xf32, #tpu.memory_space<vmem>>, vector<32x32xf32>
    %c32 = arith.constant 32 : index
    %c0_11 = arith.constant 0 : index
    %7 = vector.load %arg1[%c32, %c0_11] : memref<132x32xf32, #tpu.memory_space<vmem>>, vector<32x32xf32>
    %c64 = arith.constant 64 : index
    %c0_12 = arith.constant 0 : index
    %8 = vector.load %arg1[%c64, %c0_12] : memref<132x32xf32, #tpu.memory_space<vmem>>, vector<32x32xf32>
    %c96 = arith.constant 96 : index
    %c0_13 = arith.constant 0 : index
    %9 = vector.load %arg1[%c96, %c0_13] : memref<132x32xf32, #tpu.memory_space<vmem>>, vector<32x32xf32>
    %c128_14 = arith.constant 128 : index
    %c0_15 = arith.constant 0 : index
    %10 = vector.load %arg1[%c128_14, %c0_15] : memref<132x32xf32, #tpu.memory_space<vmem>>, vector<1x32xf32>
    %c129 = arith.constant 129 : index
    %c0_16 = arith.constant 0 : index
    %11 = vector.load %arg1[%c129, %c0_16] : memref<132x32xf32, #tpu.memory_space<vmem>>, vector<1x32xf32>
    %c130 = arith.constant 130 : index
    %c0_17 = arith.constant 0 : index
    %12 = vector.load %arg1[%c130, %c0_17] : memref<132x32xf32, #tpu.memory_space<vmem>>, vector<1x32xf32>
    %c131 = arith.constant 131 : index
    %c0_18 = arith.constant 0 : index
    %13 = vector.load %arg1[%c131, %c0_18] : memref<132x32xf32, #tpu.memory_space<vmem>>, vector<1x32xf32>
    %cst = arith.constant dense<0.000000e+00> : vector<128x32xf32>
    %14 = tpu.matmul %3, %6, %cst {dimension_numbers = #tpu.dot_dimension_numbers<[1], [1], [0], [0], [0, 0, 1, 0], [], []>} : vector<128x32xf32>, vector<32x32xf32>, vector<128x32xf32> -> vector<128x32xf32>
    %15 = vector.broadcast %10 : vector<1x32xf32> to vector<128x32xf32>
    %16 = arith.addf %14, %15 : vector<128x32xf32>
    %cst_19 = arith.constant 5.000000e-01 : f32
    %17 = vector.broadcast %cst_19 : f32 to vector<128x32xf32>
    %18 = arith.mulf %16, %17 : vector<128x32xf32>
    %cst_20 = arith.constant dense<0.000000e+00> : vector<128x32xf32>
    %19 = tpu.matmul %4, %7, %cst_20 {dimension_numbers = #tpu.dot_dimension_numbers<[1], [1], [0], [0], [0, 0, 1, 0], [], []>} : vector<128x32xf32>, vector<32x32xf32>, vector<128x32xf32> -> vector<128x32xf32>
    %20 = vector.broadcast %11 : vector<1x32xf32> to vector<128x32xf32>
    %21 = arith.addf %19, %20 : vector<128x32xf32>
    %cst_21 = arith.constant dense<0.000000e+00> : vector<128x32xf32>
    %22 = tpu.matmul %5, %8, %cst_21 {dimension_numbers = #tpu.dot_dimension_numbers<[1], [1], [0], [0], [0, 0, 1, 0], [], []>} : vector<128x32xf32>, vector<32x32xf32>, vector<128x32xf32> -> vector<128x32xf32>
    %23 = vector.broadcast %12 : vector<1x32xf32> to vector<128x32xf32>
    %24 = arith.addf %22, %23 : vector<128x32xf32>
    %cst_22 = arith.constant dense<0.000000e+00> : vector<128x128xf32>
    %25 = tpu.matmul %18, %21, %cst_22 {dimension_numbers = #tpu.dot_dimension_numbers<[1], [1], [0], [0], [0, 0, 1, 0], [], []>} : vector<128x32xf32>, vector<128x32xf32>, vector<128x128xf32> -> vector<128x128xf32>
    %26 = arith.addf %25, %0 : vector<128x128xf32>
    %cst_23 = arith.constant dense<0xFF800000> : vector<128xf32>
    %27 = vector.multi_reduction <maximumf>, %26, %cst_23 [1] : vector<128x128xf32> to vector<128xf32>
    %28 = vector.shape_cast %27 : vector<128xf32> to vector<128x1xf32>
    %29 = vector.broadcast %28 : vector<128x1xf32> to vector<128x128xf32>
    %30 = arith.subf %26, %29 : vector<128x128xf32>
    %31 = math.exp %30 : vector<128x128xf32>
    %cst_24 = arith.constant dense<0.000000e+00> : vector<128xf32>
    %32 = vector.multi_reduction <add>, %31, %cst_24 [1] : vector<128x128xf32> to vector<128xf32>
    %33 = vector.shape_cast %32 : vector<128xf32> to vector<128x1xf32>
    %34 = tpu.reciprocal %33 : vector<128x1xf32> -> vector<128x1xf32>
    %35 = vector.broadcast %34 : vector<128x1xf32> to vector<128x128xf32>
    %36 = arith.mulf %31, %35 : vector<128x128xf32>
    %cst_25 = arith.constant dense<0.000000e+00> : vector<128x32xf32>
    %37 = tpu.matmul %36, %24, %cst_25 {dimension_numbers = #tpu.dot_dimension_numbers<[1], [0], [0], [1], [0, 0, 1, 1], [], []>} : vector<128x128xf32>, vector<128x32xf32>, vector<128x32xf32> -> vector<128x32xf32>
    %cst_26 = arith.constant dense<0.000000e+00> : vector<128x32xf32>
    %38 = tpu.matmul %37, %9, %cst_26 {dimension_numbers = #tpu.dot_dimension_numbers<[1], [1], [0], [0], [0, 0, 1, 0], [], []>} : vector<128x32xf32>, vector<32x32xf32>, vector<128x32xf32> -> vector<128x32xf32>
    %39 = vector.broadcast %13 : vector<1x32xf32> to vector<128x32xf32>
    %40 = arith.addf %38, %39 : vector<128x32xf32>
    %cst_27 = arith.constant dense<0.000000e+00> : vector<128x32xf32>
    %41 = tpu.matmul %1, %40, %cst_27 {dimension_numbers = #tpu.dot_dimension_numbers<[1], [0], [0], [1], [0, 0, 1, 1], [], []>} : vector<128x128xf32>, vector<128x32xf32>, vector<128x32xf32> -> vector<128x32xf32>
    %c0_28 = arith.constant 0 : index
    %c0_29 = arith.constant 0 : index
    %42 = vector.load %arg3[%c0_28, %c0_29] : memref<128x32xf32, #tpu.memory_space<vmem>>, vector<128x32xf32>
    tpu.vector_store %arg3[%c0_28, %c0_29], %41 {strides = array<i32>} : memref<128x32xf32, #tpu.memory_space<vmem>>, vector<128x32xf32>,
    %cst_30 = arith.constant dense<0.000000e+00> : vector<8x128xf32>
    %43 = tpu.matmul %2, %36, %cst_30 {dimension_numbers = #tpu.dot_dimension_numbers<[1], [0], [0], [1], [0, 0, 1, 1], [], []>} : vector<8x128xf32>, vector<128x128xf32>, vector<8x128xf32> -> vector<8x128xf32>
    %c0_31 = arith.constant 0 : index
    %c0_32 = arith.constant 0 : index
    %44 = vector.load %arg4[%c0_31, %c0_32] : memref<8x128xf32, #tpu.memory_space<vmem>>, vector<8x128xf32>
    tpu.vector_store %arg4[%c0_31, %c0_32], %43 {strides = array<i32>} : memref<8x128xf32, #tpu.memory_space<vmem>>, vector<8x128xf32>,
    return
  }
}

</mosaic_0001>

<llo_original>
// kernel: attention_forward.1
$region0: #{attention_forward.1}
  #allocation0 [shape = 'u32[]', space=smem, size = 0x4, offset = 0x4, fixed_abs, tag = 'smem constant byte address 0x4 - core index']
  #allocation1 [shape = 'u32[72,128]{1,0:T(1,128)}', space=vmem, size = 0x9000, scoped, tag = 'internal scratch']
  %s0 = inlined_call_operand.vmem [shape: f32[384,32], index: 0, kind: input, shape index: {}]
  %s1 = inlined_call_operand.vmem [shape: f32[132,32], index: 1, kind: input, shape index: {}]
  %s2 = inlined_call_operand.vmem [shape: f32[264,128], index: 2, kind: input, shape index: {}]
  %s3 = inlined_call_operand.vmem [shape: f32[128,32], index: 3, kind: output, shape index: {0}]
  %s4 = inlined_call_operand.vmem [shape: f32[8,128], index: 4, kind: output, shape index: {1}]
  %5 = xla_tuple %s3, %s4
  %s6 = sld [smem:[#allocation0]]
  $region30: #{attention_forward.1} parent=0
    _
  %s8 = ssub.s32 1, %s6
  %s9 = scalar_select 0, %s8, %s6
  // Predicated region
  $region2: #{attention_forward.1} parent=0 // pred_check
    _
  $region3: #{attention_forward.1} parent=0 // pred_check_branch
    %11 = sbr.rel (0) target = $region5
  $region4: #{attention_forward.1} parent=0 // pred_region
    _
  $region5: #{attention_forward.1} parent=0 // pred_fallthru
    _
  // Predicated region
  $region6: #{attention_forward.1} parent=0 // pred_check
    _
  $region7: #{attention_forward.1} parent=0 // pred_check_branch
    %13 = sbr.rel (0) target = $region9
  $region8: #{attention_forward.1} parent=0 // pred_region
    _
  $region9: #{attention_forward.1} parent=0 // pred_fallthru
    _
  // Predicated region
  $region10: #{attention_forward.1} parent=0 // pred_check
    _
  $region11: #{attention_forward.1} parent=0 // pred_check_branch
    %15 = sbr.rel (0) target = $region13
  $region12: #{attention_forward.1} parent=0 // pred_region
    _
  $region13: #{attention_forward.1} parent=0 // pred_fallthru
    _
  %v16 = vld [vmem:[%s2] sm:$0xff]
  %v17 = vld [vmem:[%s2 + $0x8] sm:$0xff]
  %v18 = vld [vmem:[%s2 + $0x10] sm:$0xff]
  %v19 = vld [vmem:[%s2 + $0x18] sm:$0xff]
  %v20 = vld [vmem:[%s2 + $0x20] sm:$0xff]
  %v21 = vld [vmem:[%s2 + $0x28] sm:$0xff]
  %v22 = vld [vmem:[%s2 + $0x30] sm:$0xff]
  %v23 = vld [vmem:[%s2 + $0x38] sm:$0xff]
  %v24 = vld [vmem:[%s2 + $0x40] sm:$0xff]
  %v25 = vld [vmem:[%s2 + $0x48] sm:$0xff]
  %v26 = vld [vmem:[%s2 + $0x50] sm:$0xff]
  %v27 = vld [vmem:[%s2 + $0x58] sm:$0xff]
  %v28 = vld [vmem:[%s2 + $0x60] sm:$0xff]
  %v29 = vld [vmem:[%s2 + $0x68] sm:$0xff]
  %v30 = vld [vmem:[%s2 + $0x70] sm:$0xff]
  %v31 = vld [vmem:[%s2 + $0x78] sm:$0xff]
  %v32 = vld [vmem:[%s2 + $0x80] sm:$0xff]
  %v33 = vld [vmem:[%s2 + $0x88] sm:$0xff]
  %v34 = vld [vmem:[%s2 + $0x90] sm:$0xff]
  %v35 = vld [vmem:[%s2 + $0x98] sm:$0xff]
  %v36 = vld [vmem:[%s2 + $0xa0] sm:$0xff]
  %v37 = vld [vmem:[%s2 + $0xa8] sm:$0xff]
  %v38 = vld [vmem:[%s2 + $0xb0] sm:$0xff]
  %v39 = vld [vmem:[%s2 + $0xb8] sm:$0xff]
  %v40 = vld [vmem:[%s2 + $0xc0] sm:$0xff]
  %v41 = vld [vmem:[%s2 + $0xc8] sm:$0xff]
  %v42 = vld [vmem:[%s2 + $0xd0] sm:$0xff]
  %v43 = vld [vmem:[%s2 + $0xd8] sm:$0xff]
  %v44 = vld [vmem:[%s2 + $0xe0] sm:$0xff]
  %v45 = vld [vmem:[%s2 + $0xe8] sm:$0xff]
  %v46 = vld [vmem:[%s2 + $0xf0] sm:$0xff]
  %v47 = vld [vmem:[%s2 + $0xf8] sm:$0xff]
  %v48 = vld [vmem:[%s2 + $0x100] sm:$0xff]
  %v49 = vld [vmem:[%s0] sm:$0xff]
  %v50 = vld [vmem:[%s0 + $0x8] sm:$0xff]
  %v51 = vld [vmem:[%s0 + $0x10] sm:$0xff]
  %v52 = vld [vmem:[%s0 + $0x18] sm:$0xff]
  %v53 = vld [vmem:[%s0 + $0x20] sm:$0xff]
  %v54 = vld [vmem:[%s0 + $0x28] sm:$0xff]
  %v55 = vld [vmem:[%s0 + $0x30] sm:$0xff]
  %v56 = vld [vmem:[%s0 + $0x38] sm:$0xff]
  %v57 = vld [vmem:[%s0 + $0x40] sm:$0xff]
  %v58 = vld [vmem:[%s0 + $0x48] sm:$0xff]
  %v59 = vld [vmem:[%s0 + $0x50] sm:$0xff]
  %v60 = vld [vmem:[%s0 + $0x58] sm:$0xff]
  %v61 = vld [vmem:[%s0 + $0x60] sm:$0xff]
  %v62 = vld [vmem:[%s0 + $0x68] sm:$0xff]
  %v63 = vld [vmem:[%s0 + $0x70] sm:$0xff]
  %v64 = vld [vmem:[%s0 + $0x78] sm:$0xff]
  %v65 = vld [vmem:[%s0 + $0x80] sm:$0xff]
  %v66 = vld [vmem:[%s0 + $0x88] sm:$0xff]
  %v67 = vld [vmem:[%s0 + $0x90] sm:$0xff]
  %v68 = vld [vmem:[%s0 + $0x98] sm:$0xff]
  %v69 = vld [vmem:[%s0 + $0xa0] sm:$0xff]
  %v70 = vld [vmem:[%s0 + $0xa8] sm:$0xff]
  %v71 = vld [vmem:[%s0 + $0xb0] sm:$0xff]
  %v72 = vld [vmem:[%s0 + $0xb8] sm:$0xff]
  %v73 = vld [vmem:[%s0 + $0xc0] sm:$0xff]
  %v74 = vld [vmem:[%s0 + $0xc8] sm:$0xff]
  %v75 = vld [vmem:[%s0 + $0xd0] sm:$0xff]
  %v76 = vld [vmem:[%s0 + $0xd8] sm:$0xff]
  %v77 = vld [vmem:[%s0 + $0xe0] sm:$0xff]
  %v78 = vld [vmem:[%s0 + $0xe8] sm:$0xff]
  %v79 = vld [vmem:[%s0 + $0xf0] sm:$0xff]
  %v80 = vld [vmem:[%s0 + $0xf8] sm:$0xff]
  %v81 = vld [vmem:[%s0 + $0x100] sm:$0xff]
  %v82 = vld [vmem:[%s0 + $0x108] sm:$0xff]
  %v83 = vld [vmem:[%s0 + $0x110] sm:$0xff]
  %v84 = vld [vmem:[%s0 + $0x118] sm:$0xff]
  %v85 = vld [vmem:[%s0 + $0x120] sm:$0xff]
  %v86 = vld [vmem:[%s0 + $0x128] sm:$0xff]
  %v87 = vld [vmem:[%s0 + $0x130] sm:$0xff]
  %v88 = vld [vmem:[%s0 + $0x138] sm:$0xff]
  %v89 = vld [vmem:[%s0 + $0x140] sm:$0xff]
  %v90 = vld [vmem:[%s0 + $0x148] sm:$0xff]
  %v91 = vld [vmem:[%s0 + $0x150] sm:$0xff]
  %v92 = vld [vmem:[%s0 + $0x158] sm:$0xff]
  %v93 = vld [vmem:[%s0 + $0x160] sm:$0xff]
  %v94 = vld [vmem:[%s0 + $0x168] sm:$0xff]
  %v95 = vld [vmem:[%s0 + $0x170] sm:$0xff]
  %v96 = vld [vmem:[%s0 + $0x178] sm:$0xff]
  %v97 = vld [vmem:[%s1] sm:$0xff]
  %v98 = vld [vmem:[%s1 + $0x8] sm:$0xff]
  %v99 = vld [vmem:[%s1 + $0x10] sm:$0xff]
  %v100 = vld [vmem:[%s1 + $0x18] sm:$0xff]
  %v101 = vld [vmem:[%s1 + $0x20] sm:$0xff]
  %v102 = vld [vmem:[%s1 + $0x28] sm:$0xff]
  %v103 = vld [vmem:[%s1 + $0x30] sm:$0xff]
  %v104 = vld [vmem:[%s1 + $0x38] sm:$0xff]
  %v105 = vld [vmem:[%s1 + $0x40] sm:$0xff]
  %v106 = vld [vmem:[%s1 + $0x48] sm:$0xff]
  %v107 = vld [vmem:[%s1 + $0x50] sm:$0xff]
  %v108 = vld [vmem:[%s1 + $0x58] sm:$0xff]
  %v109 = vld [vmem:[%s1 + $0x60] sm:$0xff]
  %v110 = vld [vmem:[%s1 + $0x68] sm:$0xff]
  %v111 = vld [vmem:[%s1 + $0x70] sm:$0xff]
  %v112 = vld [vmem:[%s1 + $0x78] sm:$0xff]
  %v113 = vld [vmem:[%s1 + $0x80] sm:$0x1]
  %v114 = vld [vmem:[%s1 + $0x81] sm:$0x1]
  %v115 = vld [vmem:[%s1 + $0x82] sm:$0x1]
  %v116 = vld [vmem:[%s1 + $0x83] sm:$0x1]
  %v117 = vperm.slane %v113, 0
  %vm118 = vcmask 261120
  %v120 = vsel %vm118, %v49, 0
  %v123 = vsel %vm118, %v50, 0
  %v126 = vsel %vm118, %v51, 0
  %v129 = vsel %vm118, %v52, 0
  %v132 = vsel %vm118, %v53, 0
  %v135 = vsel %vm118, %v54, 0
  %v138 = vsel %vm118, %v55, 0
  %v141 = vsel %vm118, %v56, 0
  %v144 = vsel %vm118, %v57, 0
  %v147 = vsel %vm118, %v58, 0
  %v150 = vsel %vm118, %v59, 0
  %v153 = vsel %vm118, %v60, 0
  %v156 = vsel %vm118, %v61, 0
  %v159 = vsel %vm118, %v62, 0
  %v162 = vsel %vm118, %v63, 0
  %v165 = vsel %vm118, %v64, 0
  %v168 = vsel %vm118, %v97, 0
  %v171 = vsel %vm118, %v98, 0
  %v174 = vsel %vm118, %v99, 0
  %v177 = vsel %vm118, %v100, 0
  %179 = vmatpush.xpose.msra.mxu0 0.0
  %180 = vmatpush.xpose.msra.mxu0 0.0
  %181 = vmatpush.xpose.msra.mxu0 0.0
  %182 = vmatpush.xpose.msra.mxu0 0.0
  %183 = vmatpush.xpose.msra.mxu0 0.0
  %184 = vmatpush.xpose.msra.mxu0 0.0
  %185 = vmatpush.xpose.msra.mxu0 0.0
  %186 = vmatpush.xpose.msra.mxu0 0.0
  %187 = vmatpush.xpose.msra.mxu0 0.0
  %188 = vmatpush.xpose.msra.mxu0 0.0
  %189 = vmatpush.xpose.msra.mxu0 0.0
  %190 = vmatpush.xpose.msra.mxu0 0.0
  %191 = vmatpush.xpose.msra.mxu0 %v177
  %192 = vmatpush.xpose.msra.mxu0 %v174
  %193 = vmatpush.xpose.msra.mxu0 %v171
  %194 = vmatpush.xpose.msra.mxu0 %v168
  %195 = vmatmul.f32.gmra.mxu0 %v120
  %v196 = vpop.f32.mrf.mxu0
  %v197 = vadd.f32 %v117, %v196
  %198 = vmatmul.f32.gmra.mxu0 %v123
  %v199 = vpop.f32.mrf.mxu0
  %v200 = vadd.f32 %v117, %v199
  %201 = vmatmul.f32.gmra.mxu0 %v126
  %v202 = vpop.f32.mrf.mxu0
  %v203 = vadd.f32 %v117, %v202
  %204 = vmatmul.f32.gmra.mxu0 %v129
  %v205 = vpop.f32.mrf.mxu0
  %v206 = vadd.f32 %v117, %v205
  %207 = vmatmul.f32.gmra.mxu0 %v132
  %v208 = vpop.f32.mrf.mxu0
  %v209 = vadd.f32 %v117, %v208
  %210 = vmatmul.f32.gmra.mxu0 %v135
  %v211 = vpop.f32.mrf.mxu0
  %v212 = vadd.f32 %v117, %v211
  %213 = vmatmul.f32.gmra.mxu0 %v138
  %v214 = vpop.f32.mrf.mxu0
  %v215 = vadd.f32 %v117, %v214
  %216 = vmatmul.f32.gmra.mxu0 %v141
  %v217 = vpop.f32.mrf.mxu0
  %v218 = vadd.f32 %v117, %v217
  %219 = vmatmul.f32.gmra.mxu0 %v144
  %v220 = vpop.f32.mrf.mxu0
  %v221 = vadd.f32 %v117, %v220
  %222 = vmatmul.f32.gmra.mxu0 %v147
  %v223 = vpop.f32.mrf.mxu0
  %v224 = vadd.f32 %v117, %v223
  %225 = vmatmul.f32.gmra.mxu0 %v150
  %v226 = vpop.f32.mrf.mxu0
  %v227 = vadd.f32 %v117, %v226
  %228 = vmatmul.f32.gmra.mxu0 %v153
  %v229 = vpop.f32.mrf.mxu0
  %v230 = vadd.f32 %v117, %v229
  %231 = vmatmul.f32.gmra.mxu0 %v156
  %v232 = vpop.f32.mrf.mxu0
  %v233 = vadd.f32 %v117, %v232
  %234 = vmatmul.f32.gmra.mxu0 %v159
  %v235 = vpop.f32.mrf.mxu0
  %v236 = vadd.f32 %v117, %v235
  %237 = vmatmul.f32.gmra.mxu0 %v162
  %v238 = vpop.f32.mrf.mxu0
  %v239 = vadd.f32 %v117, %v238
  %240 = vmatmul.f32.gmra.mxu0 %v165
  %v241 = vpop.f32.mrf.mxu0
  %v242 = vadd.f32 %v117, %v241
  %243 = vdwg.mxu0
  %v244 = vmul.f32 %v197, 0.5
  %v245 = vmul.f32 %v200, 0.5
  %v246 = vmul.f32 %v203, 0.5
  %v247 = vmul.f32 %v206, 0.5
  %v248 = vmul.f32 %v209, 0.5
  %v249 = vmul.f32 %v212, 0.5
  %v250 = vmul.f32 %v215, 0.5
  %v251 = vmul.f32 %v218, 0.5
  %v252 = vmul.f32 %v221, 0.5
  %v253 = vmul.f32 %v224, 0.5
  %v254 = vmul.f32 %v227, 0.5
  %v255 = vmul.f32 %v230, 0.5
  %v256 = vmul.f32 %v233, 0.5
  %v257 = vmul.f32 %v236, 0.5
  %v258 = vmul.f32 %v239, 0.5
  %v259 = vmul.f32 %v242, 0.5
  %v260 = vperm.slane %v114, 0
  %v262 = vsel %vm118, %v65, 0
  %v265 = vsel %vm118, %v66, 0
  %v268 = vsel %vm118, %v67, 0
  %v271 = vsel %vm118, %v68, 0
  %v274 = vsel %vm118, %v69, 0
  %v277 = vsel %vm118, %v70, 0
  %v280 = vsel %vm118, %v71, 0
  %v283 = vsel %vm118, %v72, 0
  %v286 = vsel %vm118, %v73, 0
  %v289 = vsel %vm118, %v74, 0
  %v292 = vsel %vm118, %v75, 0
  %v295 = vsel %vm118, %v76, 0
  %v298 = vsel %vm118, %v77, 0
  %v301 = vsel %vm118, %v78, 0
  %v304 = vsel %vm118, %v79, 0
  %v307 = vsel %vm118, %v80, 0
  %v310 = vsel %vm118, %v101, 0
  %v313 = vsel %vm118, %v102, 0
  %v316 = vsel %vm118, %v103, 0
  %v319 = vsel %vm118, %v104, 0
  %321 = vmatpush.xpose.msra.mxu0 0.0
  %322 = vmatpush.xpose.msra.mxu0 0.0
  %323 = vmatpush.xpose.msra.mxu0 0.0
  %324 = vmatpush.xpose.msra.mxu0 0.0
  %325 = vmatpush.xpose.msra.mxu0 0.0
  %326 = vmatpush.xpose.msra.mxu0 0.0
  %327 = vmatpush.xpose.msra.mxu0 0.0
  %328 = vmatpush.xpose.msra.mxu0 0.0
  %329 = vmatpush.xpose.msra.mxu0 0.0
  %330 = vmatpush.xpose.msra.mxu0 0.0
  %331 = vmatpush.xpose.msra.mxu0 0.0
  %332 = vmatpush.xpose.msra.mxu0 0.0
  %333 = vmatpush.xpose.msra.mxu0 %v319
  %334 = vmatpush.xpose.msra.mxu0 %v316
  %335 = vmatpush.xpose.msra.mxu0 %v313
  %336 = vmatpush.xpose.msra.mxu0 %v310
  %337 = vmatmul.f32.gmra.mxu0 %v262
  %v338 = vpop.f32.mrf.mxu0
  %v339 = vadd.f32 %v260, %v338
  %340 = vmatmul.f32.gmra.mxu0 %v265
  %v341 = vpop.f32.mrf.mxu0
  %v342 = vadd.f32 %v260, %v341
  %343 = vmatmul.f32.gmra.mxu0 %v268
  %v344 = vpop.f32.mrf.mxu0
  %v345 = vadd.f32 %v260, %v344
  %346 = vmatmul.f32.gmra.mxu0 %v271
  %v347 = vpop.f32.mrf.mxu0
  %v348 = vadd.f32 %v260, %v347
  %349 = vmatmul.f32.gmra.mxu0 %v274
  %v350 = vpop.f32.mrf.mxu0
  %v351 = vadd.f32 %v260, %v350
  %352 = vmatmul.f32.gmra.mxu0 %v277
  %v353 = vpop.f32.mrf.mxu0
  %v354 = vadd.f32 %v260, %v353
  %355 = vmatmul.f32.gmra.mxu0 %v280
  %v356 = vpop.f32.mrf.mxu0
  %v357 = vadd.f32 %v260, %v356
  %358 = vmatmul.f32.gmra.mxu0 %v283
  %v359 = vpop.f32.mrf.mxu0
  %v360 = vadd.f32 %v260, %v359
  %361 = vmatmul.f32.gmra.mxu0 %v286
  %v362 = vpop.f32.mrf.mxu0
  %v363 = vadd.f32 %v260, %v362
  %364 = vmatmul.f32.gmra.mxu0 %v289
  %v365 = vpop.f32.mrf.mxu0
  %v366 = vadd.f32 %v260, %v365
  %367 = vmatmul.f32.gmra.mxu0 %v292
  %v368 = vpop.f32.mrf.mxu0
  %v369 = vadd.f32 %v260, %v368
  %370 = vmatmul.f32.gmra.mxu0 %v295
  %v371 = vpop.f32.mrf.mxu0
  %v372 = vadd.f32 %v260, %v371
  %373 = vmatmul.f32.gmra.mxu0 %v298
  %v374 = vpop.f32.mrf.mxu0
  %v375 = vadd.f32 %v260, %v374
  %376 = vmatmul.f32.gmra.mxu0 %v301
  %v377 = vpop.f32.mrf.mxu0
  %v378 = vadd.f32 %v260, %v377
  %379 = vmatmul.f32.gmra.mxu0 %v304
  %v380 = vpop.f32.mrf.mxu0
  %v381 = vadd.f32 %v260, %v380
  %382 = vmatmul.f32.gmra.mxu0 %v307
  %v383 = vpop.f32.mrf.mxu0
  %v384 = vadd.f32 %v260, %v383
  %385 = vdwg.mxu0
  %v386 = vperm.slane %v115, 0
  %v388 = vsel %vm118, %v81, 0
  %v391 = vsel %vm118, %v82, 0
  %v394 = vsel %vm118, %v83, 0
  %v397 = vsel %vm118, %v84, 0
  %v400 = vsel %vm118, %v85, 0
  %v403 = vsel %vm118, %v86, 0
  %v406 = vsel %vm118, %v87, 0
  %v409 = vsel %vm118, %v88, 0
  %v412 = vsel %vm118, %v89, 0
  %v415 = vsel %vm118, %v90, 0
  %v418 = vsel %vm118, %v91, 0
  %v421 = vsel %vm118, %v92, 0
  %v424 = vsel %vm118, %v93, 0
  %v427 = vsel %vm118, %v94, 0
  %v430 = vsel %vm118, %v95, 0
  %v433 = vsel %vm118, %v96, 0
  %v436 = vsel %vm118, %v105, 0
  %v439 = vsel %vm118, %v106, 0
  %v442 = vsel %vm118, %v107, 0
  %v445 = vsel %vm118, %v108, 0
  %447 = vmatpush.xpose.msra.mxu0 0.0
  %448 = vmatpush.xpose.msra.mxu0 0.0
  %449 = vmatpush.xpose.msra.mxu0 0.0
  %450 = vmatpush.xpose.msra.mxu0 0.0
  %451 = vmatpush.xpose.msra.mxu0 0.0
  %452 = vmatpush.xpose.msra.mxu0 0.0
  %453 = vmatpush.xpose.msra.mxu0 0.0
  %454 = vmatpush.xpose.msra.mxu0 0.0
  %455 = vmatpush.xpose.msra.mxu0 0.0
  %456 = vmatpush.xpose.msra.mxu0 0.0
  %457 = vmatpush.xpose.msra.mxu0 0.0
  %458 = vmatpush.xpose.msra.mxu0 0.0
  %459 = vmatpush.xpose.msra.mxu0 %v445
  %460 = vmatpush.xpose.msra.mxu0 %v442
  %461 = vmatpush.xpose.msra.mxu0 %v439
  %462 = vmatpush.xpose.msra.mxu0 %v436
  %463 = vmatmul.f32.gmra.mxu0 %v388
  %v464 = vpop.f32.mrf.mxu0
  %v465 = vadd.f32 %v386, %v464
  %466 = vmatmul.f32.gmra.mxu0 %v391
  %v467 = vpop.f32.mrf.mxu0
  %v468 = vadd.f32 %v386, %v467
  %469 = vmatmul.f32.gmra.mxu0 %v394
  %v470 = vpop.f32.mrf.mxu0
  %v471 = vadd.f32 %v386, %v470
  %472 = vmatmul.f32.gmra.mxu0 %v397
  %v473 = vpop.f32.mrf.mxu0
  %v474 = vadd.f32 %v386, %v473
  %475 = vmatmul.f32.gmra.mxu0 %v400
  %v476 = vpop.f32.mrf.mxu0
  %v477 = vadd.f32 %v386, %v476
  %478 = vmatmul.f32.gmra.mxu0 %v403
  %v479 = vpop.f32.mrf.mxu0
  %v480 = vadd.f32 %v386, %v479
  %481 = vmatmul.f32.gmra.mxu0 %v406
  %v482 = vpop.f32.mrf.mxu0
  %v483 = vadd.f32 %v386, %v482
  %484 = vmatmul.f32.gmra.mxu0 %v409
  %v485 = vpop.f32.mrf.mxu0
  %v486 = vadd.f32 %v386, %v485
  %487 = vmatmul.f32.gmra.mxu0 %v412
  %v488 = vpop.f32.mrf.mxu0
  %v489 = vadd.f32 %v386, %v488
  %490 = vmatmul.f32.gmra.mxu0 %v415
  %v491 = vpop.f32.mrf.mxu0
  %v492 = vadd.f32 %v386, %v491
  %493 = vmatmul.f32.gmra.mxu0 %v418
  %v494 = vpop.f32.mrf.mxu0
  %v495 = vadd.f32 %v386, %v494
  %496 = vmatmul.f32.gmra.mxu0 %v421
  %v497 = vpop.f32.mrf.mxu0
  %v498 = vadd.f32 %v386, %v497
  %499 = vmatmul.f32.gmra.mxu0 %v424
  %v500 = vpop.f32.mrf.mxu0
  %v501 = vadd.f32 %v386, %v500
  %502 = vmatmul.f32.gmra.mxu0 %v427
  %v503 = vpop.f32.mrf.mxu0
  %v504 = vadd.f32 %v386, %v503
  %505 = vmatmul.f32.gmra.mxu0 %v430
  %v506 = vpop.f32.mrf.mxu0
  %v507 = vadd.f32 %v386, %v506
  %508 = vmatmul.f32.gmra.mxu0 %v433
  %v509 = vpop.f32.mrf.mxu0
  %v510 = vadd.f32 %v386, %v509
  %511 = vdwg.mxu0
  %v513 = vsel %vm118, %v244, 0
  %v516 = vsel %vm118, %v245, 0
  %v519 = vsel %vm118, %v246, 0
  %v522 = vsel %vm118, %v247, 0
  %v525 = vsel %vm118, %v248, 0
  %v528 = vsel %vm118, %v249, 0
  %v531 = vsel %vm118, %v250, 0
  %v534 = vsel %vm118, %v251, 0
  %v537 = vsel %vm118, %v252, 0
  %v540 = vsel %vm118, %v253, 0
  %v543 = vsel %vm118, %v254, 0
  %v546 = vsel %vm118, %v255, 0
  %v549 = vsel %vm118, %v256, 0
  %v552 = vsel %vm118, %v257, 0
  %v555 = vsel %vm118, %v258, 0
  %v558 = vsel %vm118, %v259, 0
  %v561 = vsel %vm118, %v339, 0
  %v564 = vsel %vm118, %v342, 0
  %v567 = vsel %vm118, %v345, 0
  %v570 = vsel %vm118, %v348, 0
  %v573 = vsel %vm118, %v351, 0
  %v576 = vsel %vm118, %v354, 0
  %v579 = vsel %vm118, %v357, 0
  %v582 = vsel %vm118, %v360, 0
  %v585 = vsel %vm118, %v363, 0
  %v588 = vsel %vm118, %v366, 0
  %v591 = vsel %vm118, %v369, 0
  %v594 = vsel %vm118, %v372, 0
  %v597 = vsel %vm118, %v375, 0
  %v600 = vsel %vm118, %v378, 0
  %v603 = vsel %vm118, %v381, 0
  %v606 = vsel %vm118, %v384, 0
  %608 = vmatpush.xpose.msra.mxu0 %v606
  %609 = vmatpush.xpose.msra.mxu0 %v603
  %610 = vmatpush.xpose.msra.mxu0 %v600
  %611 = vmatpush.xpose.msra.mxu0 %v597
  %612 = vmatpush.xpose.msra.mxu0 %v594
  %613 = vmatpush.xpose.msra.mxu0 %v591
  %614 = vmatpush.xpose.msra.mxu0 %v588
  %615 = vmatpush.xpose.msra.mxu0 %v585
  %616 = vmatpush.xpose.msra.mxu0 %v582
  %617 = vmatpush.xpose.msra.mxu0 %v579
  %618 = vmatpush.xpose.msra.mxu0 %v576
  %619 = vmatpush.xpose.msra.mxu0 %v573
  %620 = vmatpush.xpose.msra.mxu0 %v570
  %621 = vmatpush.xpose.msra.mxu0 %v567
  %622 = vmatpush.xpose.msra.mxu0 %v564
  %623 = vmatpush.xpose.msra.mxu0 %v561
  %624 = vmatmul.f32.gmra.mxu0 %v513
  %v625 = vpop.f32.mrf.mxu0
  %v626 = vadd.f32 %v16, %v625
  %627 = vmatmul.f32.gmra.mxu0 %v516
  %v628 = vpop.f32.mrf.mxu0
  %v629 = vadd.f32 %v17, %v628
  %630 = vmatmul.f32.gmra.mxu0 %v519
  %v631 = vpop.f32.mrf.mxu0
  %v632 = vadd.f32 %v18, %v631
  %633 = vmatmul.f32.gmra.mxu0 %v522
  %v634 = vpop.f32.mrf.mxu0
  %v635 = vadd.f32 %v19, %v634
  %636 = vmatmul.f32.gmra.mxu0 %v525
  %v637 = vpop.f32.mrf.mxu0
  %v638 = vadd.f32 %v20, %v637
  %639 = vmatmul.f32.gmra.mxu0 %v528
  %v640 = vpop.f32.mrf.mxu0
  %v641 = vadd.f32 %v21, %v640
  %642 = vmatmul.f32.gmra.mxu0 %v531
  %v643 = vpop.f32.mrf.mxu0
  %v644 = vadd.f32 %v22, %v643
  %645 = vmatmul.f32.gmra.mxu0 %v534
  %v646 = vpop.f32.mrf.mxu0
  %v647 = vadd.f32 %v23, %v646
  %648 = vmatmul.f32.gmra.mxu0 %v537
  %v649 = vpop.f32.mrf.mxu0
  %v650 = vadd.f32 %v24, %v649
  %651 = vmatmul.f32.gmra.mxu0 %v540
  %v652 = vpop.f32.mrf.mxu0
  %v653 = vadd.f32 %v25, %v652
  %654 = vmatmul.f32.gmra.mxu0 %v543
  %v655 = vpop.f32.mrf.mxu0
  %v656 = vadd.f32 %v26, %v655
  %657 = vmatmul.f32.gmra.mxu0 %v546
  %v658 = vpop.f32.mrf.mxu0
  %v659 = vadd.f32 %v27, %v658
  %660 = vmatmul.f32.gmra.mxu0 %v549
  %v661 = vpop.f32.mrf.mxu0
  %v662 = vadd.f32 %v28, %v661
  %663 = vmatmul.f32.gmra.mxu0 %v552
  %v664 = vpop.f32.mrf.mxu0
  %v665 = vadd.f32 %v29, %v664
  %666 = vmatmul.f32.gmra.mxu0 %v555
  %v667 = vpop.f32.mrf.mxu0
  %v668 = vadd.f32 %v30, %v667
  %669 = vmatmul.f32.gmra.mxu0 %v558
  %v670 = vpop.f32.mrf.mxu0
  %v671 = vadd.f32 %v31, %v670
  %672 = vdwg.mxu0
  %673 = vmax.xlane.f32.xlu0 %v626
  %v674 = vpop.xlane.xlu0 %673
  %675 = vmax.xlane.f32.xlu0 %v629
  %v676 = vpop.xlane.xlu0 %675
  %677 = vmax.xlane.f32.xlu0 %v632
  %v678 = vpop.xlane.xlu0 %677
  %679 = vmax.xlane.f32.xlu0 %v635
  %v680 = vpop.xlane.xlu0 %679
  %681 = vmax.xlane.f32.xlu0 %v638
  %v682 = vpop.xlane.xlu0 %681
  %683 = vmax.xlane.f32.xlu0 %v641
  %v684 = vpop.xlane.xlu0 %683
  %685 = vmax.xlane.f32.xlu0 %v644
  %v686 = vpop.xlane.xlu0 %685
  %687 = vmax.xlane.f32.xlu0 %v647
  %v688 = vpop.xlane.xlu0 %687
  %689 = vmax.xlane.f32.xlu0 %v650
  %v690 = vpop.xlane.xlu0 %689
  %691 = vmax.xlane.f32.xlu0 %v653
  %v692 = vpop.xlane.xlu0 %691
  %693 = vmax.xlane.f32.xlu0 %v656
  %v694 = vpop.xlane.xlu0 %693
  %695 = vmax.xlane.f32.xlu0 %v659
  %v696 = vpop.xlane.xlu0 %695
  %697 = vmax.xlane.f32.xlu0 %v662
  %v698 = vpop.xlane.xlu0 %697
  %699 = vmax.xlane.f32.xlu0 %v665
  %v700 = vpop.xlane.xlu0 %699
  %701 = vmax.xlane.f32.xlu0 %v668
  %v702 = vpop.xlane.xlu0 %701
  %703 = vmax.xlane.f32.xlu0 %v671
  %v704 = vpop.xlane.xlu0 %703
  %v705 = vsub.f32 %v626, %v674
  %v706 = vsub.f32 %v629, %v676
  %v707 = vsub.f32 %v632, %v678
  %v708 = vsub.f32 %v635, %v680
  %v709 = vsub.f32 %v638, %v682
  %v710 = vsub.f32 %v641, %v684
  %v711 = vsub.f32 %v644, %v686
  %v712 = vsub.f32 %v647, %v688
  %v713 = vsub.f32 %v650, %v690
  %v714 = vsub.f32 %v653, %v692
  %v715 = vsub.f32 %v656, %v694
  %v716 = vsub.f32 %v659, %v696
  %v717 = vsub.f32 %v662, %v698
  %v718 = vsub.f32 %v665, %v700
  %v719 = vsub.f32 %v668, %v702
  %v720 = vsub.f32 %v671, %v704
  %v721 = vmul.f32 %v705, 1.442695
  %v722 = vpow.pop %v721
  %v723 = vmul.f32 %v706, 1.442695
  %v724 = vpow.pop %v723
  %v725 = vmul.f32 %v707, 1.442695
  %v726 = vpow.pop %v725
  %v727 = vmul.f32 %v708, 1.442695
  %v728 = vpow.pop %v727
  %v729 = vmul.f32 %v709, 1.442695
  %v730 = vpow.pop %v729
  %v731 = vmul.f32 %v710, 1.442695
  %v732 = vpow.pop %v731
  %v733 = vmul.f32 %v711, 1.442695
  %v734 = vpow.pop %v733
  %v735 = vmul.f32 %v712, 1.442695
  %v736 = vpow.pop %v735
  %v737 = vmul.f32 %v713, 1.442695
  %v738 = vpow.pop %v737
  %v739 = vmul.f32 %v714, 1.442695
  %v740 = vpow.pop %v739
  %v741 = vmul.f32 %v715, 1.442695
  %v742 = vpow.pop %v741
  %v743 = vmul.f32 %v716, 1.442695
  %v744 = vpow.pop %v743
  %v745 = vmul.f32 %v717, 1.442695
  %v746 = vpow.pop %v745
  %v747 = vmul.f32 %v718, 1.442695
  %v748 = vpow.pop %v747
  %v749 = vmul.f32 %v719, 1.442695
  %v750 = vpow.pop %v749
  %v751 = vmul.f32 %v720, 1.442695
  %v752 = vpow.pop %v751
  %753 = vadd.xlane.f32.xlu0 %v722
  %v754 = vpop.xlane.xlu0 %753
  %755 = vadd.xlane.f32.xlu0 %v724
  %v756 = vpop.xlane.xlu0 %755
  %757 = vadd.xlane.f32.xlu0 %v726
  %v758 = vpop.xlane.xlu0 %757
  %759 = vadd.xlane.f32.xlu0 %v728
  %v760 = vpop.xlane.xlu0 %759
  %761 = vadd.xlane.f32.xlu0 %v730
  %v762 = vpop.xlane.xlu0 %761
  %763 = vadd.xlane.f32.xlu0 %v732
  %v764 = vpop.xlane.xlu0 %763
  %765 = vadd.xlane.f32.xlu0 %v734
  %v766 = vpop.xlane.xlu0 %765
  %767 = vadd.xlane.f32.xlu0 %v736
  %v768 = vpop.xlane.xlu0 %767
  %769 = vadd.xlane.f32.xlu0 %v738
  %v770 = vpop.xlane.xlu0 %769
  %771 = vadd.xlane.f32.xlu0 %v740
  %v772 = vpop.xlane.xlu0 %771
  %773 = vadd.xlane.f32.xlu0 %v742
  %v774 = vpop.xlane.xlu0 %773
  %775 = vadd.xlane.f32.xlu0 %v744
  %v776 = vpop.xlane.xlu0 %775
  %777 = vadd.xlane.f32.xlu0 %v746
  %v778 = vpop.xlane.xlu0 %777
  %779 = vadd.xlane.f32.xlu0 %v748
  %v780 = vpop.xlane.xlu0 %779
  %781 = vadd.xlane.f32.xlu0 %v750
  %v782 = vpop.xlane.xlu0 %781
  %783 = vadd.xlane.f32.xlu0 %v752
  %v784 = vpop.xlane.xlu0 %783
  %v785 = vrcp.pop %v754
  %v786 = vmul.f32 %v754, %v785
  %v787 = vsub.f32 1.0, %v786
  %v788 = vmul.f32 %v785, %v787
  %v789 = vadd.f32 %v785, %v788
  %vm790 = vweird.f32 %v754
  %vm791 = vweird.f32 %v785
  %vm792 = vmor %vm790, %vm791
  %v793 = vsel %vm792, %v785, %v789
  %v794 = vand.u32 2147483647, %v754
  %vm795 = vcmp.eq.f32.partialorder %v794, 8.507059e+37
  %v796 = vand.u32 %v754, 2147483648
  %v797 = vor.u32 1.1754944e-38, %v796
  %v798 = vsel %vm795, %v797, %v793
  %v799 = vrcp.pop %v756
  %v800 = vmul.f32 %v756, %v799
  %v801 = vsub.f32 1.0, %v800
  %v802 = vmul.f32 %v799, %v801
  %v803 = vadd.f32 %v799, %v802
  %vm804 = vweird.f32 %v756
  %vm805 = vweird.f32 %v799
  %vm806 = vmor %vm804, %vm805
  %v807 = vsel %vm806, %v799, %v803
  %v808 = vand.u32 2147483647, %v756
  %vm809 = vcmp.eq.f32.partialorder %v808, 8.507059e+37
  %v810 = vand.u32 %v756, 2147483648
  %v811 = vor.u32 1.1754944e-38, %v810
  %v812 = vsel %vm809, %v811, %v807
  %v813 = vrcp.pop %v758
  %v814 = vmul.f32 %v758, %v813
  %v815 = vsub.f32 1.0, %v814
  %v816 = vmul.f32 %v813, %v815
  %v817 = vadd.f32 %v813, %v816
  %vm818 = vweird.f32 %v758
  %vm819 = vweird.f32 %v813
  %vm820 = vmor %vm818, %vm819
  %v821 = vsel %vm820, %v813, %v817
  %v822 = vand.u32 2147483647, %v758
  %vm823 = vcmp.eq.f32.partialorder %v822, 8.507059e+37
  %v824 = vand.u32 %v758, 2147483648
  %v825 = vor.u32 1.1754944e-38, %v824
  %v826 = vsel %vm823, %v825, %v821
  %v827 = vrcp.pop %v760
  %v828 = vmul.f32 %v760, %v827
  %v829 = vsub.f32 1.0, %v828
  %v830 = vmul.f32 %v827, %v829
  %v831 = vadd.f32 %v827, %v830
  %vm832 = vweird.f32 %v760
  %vm833 = vweird.f32 %v827
  %vm834 = vmor %vm832, %vm833
  %v835 = vsel %vm834, %v827, %v831
  %v836 = vand.u32 2147483647, %v760
  %vm837 = vcmp.eq.f32.partialorder %v836, 8.507059e+37
  %v838 = vand.u32 %v760, 2147483648
  %v839 = vor.u32 1.1754944e-38, %v838
  %v840 = vsel %vm837, %v839, %v835
  %v841 = vrcp.pop %v762
  %v842 = vmul.f32 %v762, %v841
  %v843 = vsub.f32 1.0, %v842
  %v844 = vmul.f32 %v841, %v843
  %v845 = vadd.f32 %v841, %v844
  %vm846 = vweird.f32 %v762
  %vm847 = vweird.f32 %v841
  %vm848 = vmor %vm846, %vm847
  %v849 = vsel %vm848, %v841, %v845
  %v850 = vand.u32 2147483647, %v762
  %vm851 = vcmp.eq.f32.partialorder %v850, 8.507059e+37
  %v852 = vand.u32 %v762, 2147483648
  %v853 = vor.u32 1.1754944e-38, %v852
  %v854 = vsel %vm851, %v853, %v849
  %v855 = vrcp.pop %v764
  %v856 = vmul.f32 %v764, %v855
  %v857 = vsub.f32 1.0, %v856
  %v858 = vmul.f32 %v855, %v857
  %v859 = vadd.f32 %v855, %v858
  %vm860 = vweird.f32 %v764
  %vm861 = vweird.f32 %v855
  %vm862 = vmor %vm860, %vm861
  %v863 = vsel %vm862, %v855, %v859
  %v864 = vand.u32 2147483647, %v764
  %vm865 = vcmp.eq.f32.partialorder %v864, 8.507059e+37
  %v866 = vand.u32 %v764, 2147483648
  %v867 = vor.u32 1.1754944e-38, %v866
  %v868 = vsel %vm865, %v867, %v863
  %v869 = vrcp.pop %v766
  %v870 = vmul.f32 %v766, %v869
  %v871 = vsub.f32 1.0, %v870
  %v872 = vmul.f32 %v869, %v871
  %v873 = vadd.f32 %v869, %v872
  %vm874 = vweird.f32 %v766
  %vm875 = vweird.f32 %v869
  %vm876 = vmor %vm874, %vm875
  %v877 = vsel %vm876, %v869, %v873
  %v878 = vand.u32 2147483647, %v766
  %vm879 = vcmp.eq.f32.partialorder %v878, 8.507059e+37
  %v880 = vand.u32 %v766, 2147483648
  %v881 = vor.u32 1.1754944e-38, %v880
  %v882 = vsel %vm879, %v881, %v877
  %v883 = vrcp.pop %v768
  %v884 = vmul.f32 %v768, %v883
  %v885 = vsub.f32 1.0, %v884
  %v886 = vmul.f32 %v883, %v885
  %v887 = vadd.f32 %v883, %v886
  %vm888 = vweird.f32 %v768
  %vm889 = vweird.f32 %v883
  %vm890 = vmor %vm888, %vm889
  %v891 = vsel %vm890, %v883, %v887
  %v892 = vand.u32 2147483647, %v768
  %vm893 = vcmp.eq.f32.partialorder %v892, 8.507059e+37
  %v894 = vand.u32 %v768, 2147483648
  %v895 = vor.u32 1.1754944e-38, %v894
  %v896 = vsel %vm893, %v895, %v891
  %v897 = vrcp.pop %v770
  %v898 = vmul.f32 %v770, %v897
  %v899 = vsub.f32 1.0, %v898
  %v900 = vmul.f32 %v897, %v899
  %v901 = vadd.f32 %v897, %v900
  %vm902 = vweird.f32 %v770
  %vm903 = vweird.f32 %v897
  %vm904 = vmor %vm902, %vm903
  %v905 = vsel %vm904, %v897, %v901
  %v906 = vand.u32 2147483647, %v770
  %vm907 = vcmp.eq.f32.partialorder %v906, 8.507059e+37
  %v908 = vand.u32 %v770, 2147483648
  %v909 = vor.u32 1.1754944e-38, %v908
  %v910 = vsel %vm907, %v909, %v905
  %v911 = vrcp.pop %v772
  %v912 = vmul.f32 %v772, %v911
  %v913 = vsub.f32 1.0, %v912
  %v914 = vmul.f32 %v911, %v913
  %v915 = vadd.f32 %v911, %v914
  %vm916 = vweird.f32 %v772
  %vm917 = vweird.f32 %v911
  %vm918 = vmor %vm916, %vm917
  %v919 = vsel %vm918, %v911, %v915
  %v920 = vand.u32 2147483647, %v772
  %vm921 = vcmp.eq.f32.partialorder %v920, 8.507059e+37
  %v922 = vand.u32 %v772, 2147483648
  %v923 = vor.u32 1.1754944e-38, %v922
  %v924 = vsel %vm921, %v923, %v919
  %v925 = vrcp.pop %v774
  %v926 = vmul.f32 %v774, %v925
  %v927 = vsub.f32 1.0, %v926
  %v928 = vmul.f32 %v925, %v927
  %v929 = vadd.f32 %v925, %v928
  %vm930 = vweird.f32 %v774
  %vm931 = vweird.f32 %v925
  %vm932 = vmor %vm930, %vm931
  %v933 = vsel %vm932, %v925, %v929
  %v934 = vand.u32 2147483647, %v774
  %vm935 = vcmp.eq.f32.partialorder %v934, 8.507059e+37
  %v936 = vand.u32 %v774, 2147483648
  %v937 = vor.u32 1.1754944e-38, %v936
  %v938 = vsel %vm935, %v937, %v933
  %v939 = vrcp.pop %v776
  %v940 = vmul.f32 %v776, %v939
  %v941 = vsub.f32 1.0, %v940
  %v942 = vmul.f32 %v939, %v941
  %v943 = vadd.f32 %v939, %v942
  %vm944 = vweird.f32 %v776
  %vm945 = vweird.f32 %v939
  %vm946 = vmor %vm944, %vm945
  %v947 = vsel %vm946, %v939, %v943
  %v948 = vand.u32 2147483647, %v776
  %vm949 = vcmp.eq.f32.partialorder %v948, 8.507059e+37
  %v950 = vand.u32 %v776, 2147483648
  %v951 = vor.u32 1.1754944e-38, %v950
  %v952 = vsel %vm949, %v951, %v947
  %v953 = vrcp.pop %v778
  %v954 = vmul.f32 %v778, %v953
  %v955 = vsub.f32 1.0, %v954
  %v956 = vmul.f32 %v953, %v955
  %v957 = vadd.f32 %v953, %v956
  %vm958 = vweird.f32 %v778
  %vm959 = vweird.f32 %v953
  %vm960 = vmor %vm958, %vm959
  %v961 = vsel %vm960, %v953, %v957
  %v962 = vand.u32 2147483647, %v778
  %vm963 = vcmp.eq.f32.partialorder %v962, 8.507059e+37
  %v964 = vand.u32 %v778, 2147483648
  %v965 = vor.u32 1.1754944e-38, %v964
  %v966 = vsel %vm963, %v965, %v961
  %v967 = vrcp.pop %v780
  %v968 = vmul.f32 %v780, %v967
  %v969 = vsub.f32 1.0, %v968
  %v970 = vmul.f32 %v967, %v969
  %v971 = vadd.f32 %v967, %v970
  %vm972 = vweird.f32 %v780
  %vm973 = vweird.f32 %v967
  %vm974 = vmor %vm972, %vm973
  %v975 = vsel %vm974, %v967, %v971
  %v976 = vand.u32 2147483647, %v780
  %vm977 = vcmp.eq.f32.partialorder %v976, 8.507059e+37
  %v978 = vand.u32 %v780, 2147483648
  %v979 = vor.u32 1.1754944e-38, %v978
  %v980 = vsel %vm977, %v979, %v975
  %v981 = vrcp.pop %v782
  %v982 = vmul.f32 %v782, %v981
  %v983 = vsub.f32 1.0, %v982
  %v984 = vmul.f32 %v981, %v983
  %v985 = vadd.f32 %v981, %v984
  %vm986 = vweird.f32 %v782
  %vm987 = vweird.f32 %v981
  %vm988 = vmor %vm986, %vm987
  %v989 = vsel %vm988, %v981, %v985
  %v990 = vand.u32 2147483647, %v782
  %vm991 = vcmp.eq.f32.partialorder %v990, 8.507059e+37
  %v992 = vand.u32 %v782, 2147483648
  %v993 = vor.u32 1.1754944e-38, %v992
  %v994 = vsel %vm991, %v993, %v989
  %v995 = vrcp.pop %v784
  %v996 = vmul.f32 %v784, %v995
  %v997 = vsub.f32 1.0, %v996
  %v998 = vmul.f32 %v995, %v997
  %v999 = vadd.f32 %v995, %v998
  %vm1000 = vweird.f32 %v784
  %vm1001 = vweird.f32 %v995
  %vm1002 = vmor %vm1000, %vm1001
  %v1003 = vsel %vm1002, %v995, %v999
  %v1004 = vand.u32 2147483647, %v784
  %vm1005 = vcmp.eq.f32.partialorder %v1004, 8.507059e+37
  %v1006 = vand.u32 %v784, 2147483648
  %v1007 = vor.u32 1.1754944e-38, %v1006
  %v1008 = vsel %vm1005, %v1007, %v1003
  %v1009 = vmul.f32 %v722, %v798
  %v1010 = vmul.f32 %v724, %v812
  %v1011 = vmul.f32 %v726, %v826
  %v1012 = vmul.f32 %v728, %v840
  %v1013 = vmul.f32 %v730, %v854
  %v1014 = vmul.f32 %v732, %v868
  %v1015 = vmul.f32 %v734, %v882
  %v1016 = vmul.f32 %v736, %v896
  %v1017 = vmul.f32 %v738, %v910
  %v1018 = vmul.f32 %v740, %v924
  %v1019 = vmul.f32 %v742, %v938
  %v1020 = vmul.f32 %v744, %v952
  %v1021 = vmul.f32 %v746, %v966
  %v1022 = vmul.f32 %v748, %v980
  %v1023 = vmul.f32 %v750, %v994
  %v1024 = vmul.f32 %v752, %v1008
  %1025 = vmatpush.msra.mxu0 %v510
  %1026 = vmatpush.msra.mxu0 %v507
  %1027 = vmatpush.msra.mxu0 %v504
  %1028 = vmatpush.msra.mxu0 %v501
  %1029 = vmatpush.msra.mxu0 %v498
  %1030 = vmatpush.msra.mxu0 %v495
  %1031 = vmatpush.msra.mxu0 %v492
  %1032 = vmatpush.msra.mxu0 %v489
  %1033 = vmatpush.msra.mxu0 %v486
  %1034 = vmatpush.msra.mxu0 %v483
  %1035 = vmatpush.msra.mxu0 %v480
  %1036 = vmatpush.msra.mxu0 %v477
  %1037 = vmatpush.msra.mxu0 %v474
  %1038 = vmatpush.msra.mxu0 %v471
  %1039 = vmatpush.msra.mxu0 %v468
  %1040 = vmatpush.msra.mxu0 %v465
  %1041 = vmatmul.f32.gmra.mxu0 %v1009
  %v1042 = vpop.f32.mrf.mxu0
  %v1043 = vadd.f32 0.0, %v1042
  %1044 = vmatmul.f32.gmra.mxu0 %v1010
  %v1045 = vpop.f32.mrf.mxu0
  %v1046 = vadd.f32 0.0, %v1045
  %1047 = vmatmul.f32.gmra.mxu0 %v1011
  %v1048 = vpop.f32.mrf.mxu0
  %v1049 = vadd.f32 0.0, %v1048
  %1050 = vmatmul.f32.gmra.mxu0 %v1012
  %v1051 = vpop.f32.mrf.mxu0
  %v1052 = vadd.f32 0.0, %v1051
  %1053 = vmatmul.f32.gmra.mxu0 %v1013
  %v1054 = vpop.f32.mrf.mxu0
  %v1055 = vadd.f32 0.0, %v1054
  %1056 = vmatmul.f32.gmra.mxu0 %v1014
  %v1057 = vpop.f32.mrf.mxu0
  %v1058 = vadd.f32 0.0, %v1057
  %1059 = vmatmul.f32.gmra.mxu0 %v1015
  %v1060 = vpop.f32.mrf.mxu0
  %v1061 = vadd.f32 0.0, %v1060
  %1062 = vmatmul.f32.gmra.mxu0 %v1016
  %v1063 = vpop.f32.mrf.mxu0
  %v1064 = vadd.f32 0.0, %v1063
  %1065 = vmatmul.f32.gmra.mxu0 %v1017
  %v1066 = vpop.f32.mrf.mxu0
  %v1067 = vadd.f32 0.0, %v1066
  %1068 = vmatmul.f32.gmra.mxu0 %v1018
  %v1069 = vpop.f32.mrf.mxu0
  %v1070 = vadd.f32 0.0, %v1069
  %1071 = vmatmul.f32.gmra.mxu0 %v1019
  %v1072 = vpop.f32.mrf.mxu0
  %v1073 = vadd.f32 0.0, %v1072
  %1074 = vmatmul.f32.gmra.mxu0 %v1020
  %v1075 = vpop.f32.mrf.mxu0
  %v1076 = vadd.f32 0.0, %v1075
  %1077 = vmatmul.f32.gmra.mxu0 %v1021
  %v1078 = vpop.f32.mrf.mxu0
  %v1079 = vadd.f32 0.0, %v1078
  %1080 = vmatmul.f32.gmra.mxu0 %v1022
  %v1081 = vpop.f32.mrf.mxu0
  %v1082 = vadd.f32 0.0, %v1081
  %1083 = vmatmul.f32.gmra.mxu0 %v1023
  %v1084 = vpop.f32.mrf.mxu0
  %v1085 = vadd.f32 0.0, %v1084
  %1086 = vmatmul.f32.gmra.mxu0 %v1024
  %v1087 = vpop.f32.mrf.mxu0
  %v1088 = vadd.f32 0.0, %v1087
  %1089 = vdwg.mxu0
  %v1090 = vperm.slane %v116, 0
  %v1092 = vsel %vm118, %v1043, 0
  %v1095 = vsel %vm118, %v1046, 0
  %v1098 = vsel %vm118, %v1049, 0
  %v1101 = vsel %vm118, %v1052, 0
  %v1104 = vsel %vm118, %v1055, 0
  %v1107 = vsel %vm118, %v1058, 0
  %v1110 = vsel %vm118, %v1061, 0
  %v1113 = vsel %vm118, %v1064, 0
  %v1116 = vsel %vm118, %v1067, 0
  %v1119 = vsel %vm118, %v1070, 0
  %v1122 = vsel %vm118, %v1073, 0
  %v1125 = vsel %vm118, %v1076, 0
  %v1128 = vsel %vm118, %v1079, 0
  %v1131 = vsel %vm118, %v1082, 0
  %v1134 = vsel %vm118, %v1085, 0
  %v1137 = vsel %vm118, %v1088, 0
  %v1140 = vsel %vm118, %v109, 0
  %v1143 = vsel %vm118, %v110, 0
  %v1146 = vsel %vm118, %v111, 0
  %v1149 = vsel %vm118, %v112, 0
  %1151 = vmatpush.xpose.msra.mxu0 0.0
  %1152 = vmatpush.xpose.msra.mxu0 0.0
  %1153 = vmatpush.xpose.msra.mxu0 0.0
  %1154 = vmatpush.xpose.msra.mxu0 0.0
  %1155 = vmatpush.xpose.msra.mxu0 0.0
  %1156 = vmatpush.xpose.msra.mxu0 0.0
  %1157 = vmatpush.xpose.msra.mxu0 0.0
  %1158 = vmatpush.xpose.msra.mxu0 0.0
  %1159 = vmatpush.xpose.msra.mxu0 0.0
  %1160 = vmatpush.xpose.msra.mxu0 0.0
  %1161 = vmatpush.xpose.msra.mxu0 0.0
  %1162 = vmatpush.xpose.msra.mxu0 0.0
  %1163 = vmatpush.xpose.msra.mxu0 %v1149
  %1164 = vmatpush.xpose.msra.mxu0 %v1146
  %1165 = vmatpush.xpose.msra.mxu0 %v1143
  %1166 = vmatpush.xpose.msra.mxu0 %v1140
  %1167 = vmatmul.f32.gmra.mxu0 %v1092
  %v1168 = vpop.f32.mrf.mxu0
  %v1169 = vadd.f32 %v1090, %v1168
  %1170 = vmatmul.f32.gmra.mxu0 %v1095
  %v1171 = vpop.f32.mrf.mxu0
  %v1172 = vadd.f32 %v1090, %v1171
  %1173 = vmatmul.f32.gmra.mxu0 %v1098
  %v1174 = vpop.f32.mrf.mxu0
  %v1175 = vadd.f32 %v1090, %v1174
  %1176 = vmatmul.f32.gmra.mxu0 %v1101
  %v1177 = vpop.f32.mrf.mxu0
  %v1178 = vadd.f32 %v1090, %v1177
  %1179 = vmatmul.f32.gmra.mxu0 %v1104
  %v1180 = vpop.f32.mrf.mxu0
  %v1181 = vadd.f32 %v1090, %v1180
  %1182 = vmatmul.f32.gmra.mxu0 %v1107
  %v1183 = vpop.f32.mrf.mxu0
  %v1184 = vadd.f32 %v1090, %v1183
  %1185 = vmatmul.f32.gmra.mxu0 %v1110
  %v1186 = vpop.f32.mrf.mxu0
  %v1187 = vadd.f32 %v1090, %v1186
  %1188 = vmatmul.f32.gmra.mxu0 %v1113
  %v1189 = vpop.f32.mrf.mxu0
  %v1190 = vadd.f32 %v1090, %v1189
  %1191 = vmatmul.f32.gmra.mxu0 %v1116
  %v1192 = vpop.f32.mrf.mxu0
  %v1193 = vadd.f32 %v1090, %v1192
  %1194 = vmatmul.f32.gmra.mxu0 %v1119
  %v1195 = vpop.f32.mrf.mxu0
  %v1196 = vadd.f32 %v1090, %v1195
  %1197 = vmatmul.f32.gmra.mxu0 %v1122
  %v1198 = vpop.f32.mrf.mxu0
  %v1199 = vadd.f32 %v1090, %v1198
  %1200 = vmatmul.f32.gmra.mxu0 %v1125
  %v1201 = vpop.f32.mrf.mxu0
  %v1202 = vadd.f32 %v1090, %v1201
  %1203 = vmatmul.f32.gmra.mxu0 %v1128
  %v1204 = vpop.f32.mrf.mxu0
  %v1205 = vadd.f32 %v1090, %v1204
  %1206 = vmatmul.f32.gmra.mxu0 %v1131
  %v1207 = vpop.f32.mrf.mxu0
  %v1208 = vadd.f32 %v1090, %v1207
  %1209 = vmatmul.f32.gmra.mxu0 %v1134
  %v1210 = vpop.f32.mrf.mxu0
  %v1211 = vadd.f32 %v1090, %v1210
  %1212 = vmatmul.f32.gmra.mxu0 %v1137
  %v1213 = vpop.f32.mrf.mxu0
  %v1214 = vadd.f32 %v1090, %v1213
  %1215 = vdwg.mxu0
  %1216 = vmatpush.msra.mxu0 %v1214
  %1217 = vmatpush.msra.mxu0 %v1211
  %1218 = vmatpush.msra.mxu0 %v1208
  %1219 = vmatpush.msra.mxu0 %v1205
  %1220 = vmatpush.msra.mxu0 %v1202
  %1221 = vmatpush.msra.mxu0 %v1199
  %1222 = vmatpush.msra.mxu0 %v1196
  %1223 = vmatpush.msra.mxu0 %v1193
  %1224 = vmatpush.msra.mxu0 %v1190
  %1225 = vmatpush.msra.mxu0 %v1187
  %1226 = vmatpush.msra.mxu0 %v1184
  %1227 = vmatpush.msra.mxu0 %v1181
  %1228 = vmatpush.msra.mxu0 %v1178
  %1229 = vmatpush.msra.mxu0 %v1175
  %1230 = vmatpush.msra.mxu0 %v1172
  %1231 = vmatpush.msra.mxu0 %v1169
  %1232 = vmatmul.f32.gmra.mxu0 %v32
  %v1233 = vpop.f32.mrf.mxu0
  %v1234 = vadd.f32 0.0, %v1233
  %1235 = vmatmul.f32.gmra.mxu0 %v33
  %v1236 = vpop.f32.mrf.mxu0
  %v1237 = vadd.f32 0.0, %v1236
  %1238 = vmatmul.f32.gmra.mxu0 %v34
  %v1239 = vpop.f32.mrf.mxu0
  %v1240 = vadd.f32 0.0, %v1239
  %1241 = vmatmul.f32.gmra.mxu0 %v35
  %v1242 = vpop.f32.mrf.mxu0
  %v1243 = vadd.f32 0.0, %v1242
  %1244 = vmatmul.f32.gmra.mxu0 %v36
  %v1245 = vpop.f32.mrf.mxu0
  %v1246 = vadd.f32 0.0, %v1245
  %1247 = vmatmul.f32.gmra.mxu0 %v37
  %v1248 = vpop.f32.mrf.mxu0
  %v1249 = vadd.f32 0.0, %v1248
  %1250 = vmatmul.f32.gmra.mxu0 %v38
  %v1251 = vpop.f32.mrf.mxu0
  %v1252 = vadd.f32 0.0, %v1251
  %1253 = vmatmul.f32.gmra.mxu0 %v39
  %v1254 = vpop.f32.mrf.mxu0
  %v1255 = vadd.f32 0.0, %v1254
  %1256 = vmatmul.f32.gmra.mxu0 %v40
  %v1257 = vpop.f32.mrf.mxu0
  %v1258 = vadd.f32 0.0, %v1257
  %1259 = vmatmul.f32.gmra.mxu0 %v41
  %v1260 = vpop.f32.mrf.mxu0
  %v1261 = vadd.f32 0.0, %v1260
  %1262 = vmatmul.f32.gmra.mxu0 %v42
  %v1263 = vpop.f32.mrf.mxu0
  %v1264 = vadd.f32 0.0, %v1263
  %1265 = vmatmul.f32.gmra.mxu0 %v43
  %v1266 = vpop.f32.mrf.mxu0
  %v1267 = vadd.f32 0.0, %v1266
  %1268 = vmatmul.f32.gmra.mxu0 %v44
  %v1269 = vpop.f32.mrf.mxu0
  %v1270 = vadd.f32 0.0, %v1269
  %1271 = vmatmul.f32.gmra.mxu0 %v45
  %v1272 = vpop.f32.mrf.mxu0
  %v1273 = vadd.f32 0.0, %v1272
  %1274 = vmatmul.f32.gmra.mxu0 %v46
  %v1275 = vpop.f32.mrf.mxu0
  %v1276 = vadd.f32 0.0, %v1275
  %1277 = vmatmul.f32.gmra.mxu0 %v47
  %v1278 = vpop.f32.mrf.mxu0
  %v1279 = vadd.f32 0.0, %v1278
  %1280 = vdwg.mxu0
  %1281 = vst.msk [vmem:[%s3] sm:$0xff] %vm118, %v1234
  %1282 = vst.msk [vmem:[%s3 + $0x8] sm:$0xff] %vm118, %v1237
  %1283 = vst.msk [vmem:[%s3 + $0x10] sm:$0xff] %vm118, %v1240
  %1284 = vst.msk [vmem:[%s3 + $0x18] sm:$0xff] %vm118, %v1243
  %1285 = vst.msk [vmem:[%s3 + $0x20] sm:$0xff] %vm118, %v1246
  %1286 = vst.msk [vmem:[%s3 + $0x28] sm:$0xff] %vm118, %v1249
  %1287 = vst.msk [vmem:[%s3 + $0x30] sm:$0xff] %vm118, %v1252
  %1288 = vst.msk [vmem:[%s3 + $0x38] sm:$0xff] %vm118, %v1255
  %1289 = vst.msk [vmem:[%s3 + $0x40] sm:$0xff] %vm118, %v1258
  %1290 = vst.msk [vmem:[%s3 + $0x48] sm:$0xff] %vm118, %v1261
  %1291 = vst.msk [vmem:[%s3 + $0x50] sm:$0xff] %vm118, %v1264
  %1292 = vst.msk [vmem:[%s3 + $0x58] sm:$0xff] %vm118, %v1267
  %1293 = vst.msk [vmem:[%s3 + $0x60] sm:$0xff] %vm118, %v1270
  %1294 = vst.msk [vmem:[%s3 + $0x68] sm:$0xff] %vm118, %v1273
  %1295 = vst.msk [vmem:[%s3 + $0x70] sm:$0xff] %vm118, %v1276
  %1296 = vst.msk [vmem:[%s3 + $0x78] sm:$0xff] %vm118, %v1279
  %1297 = vmatpush.msra.mxu0 %v1024
  %1298 = vmatpush.msra.mxu0 %v1023
  %1299 = vmatpush.msra.mxu0 %v1022
  %1300 = vmatpush.msra.mxu0 %v1021
  %1301 = vmatpush.msra.mxu0 %v1020
  %1302 = vmatpush.msra.mxu0 %v1019
  %1303 = vmatpush.msra.mxu0 %v1018
  %1304 = vmatpush.msra.mxu0 %v1017
  %1305 = vmatpush.msra.mxu0 %v1016
  %1306 = vmatpush.msra.mxu0 %v1015
  %1307 = vmatpush.msra.mxu0 %v1014
  %1308 = vmatpush.msra.mxu0 %v1013
  %1309 = vmatpush.msra.mxu0 %v1012
  %1310 = vmatpush.msra.mxu0 %v1011
  %1311 = vmatpush.msra.mxu0 %v1010
  %1312 = vmatpush.msra.mxu0 %v1009
  %1313 = vmatmul.f32.gmra.mxu0 %v48
  %v1314 = vpop.f32.mrf.mxu0
  %v1315 = vadd.f32 0.0, %v1314
  %1316 = vdwg.mxu0
  %1317 = vst [vmem:[%s4] sm:$0xff] %v1315
  // Predicated region
  $region14: #{attention_forward.1} parent=0 // pred_check
    _
  $region15: #{attention_forward.1} parent=0 // pred_check_branch
    %1319 = sbr.rel (0) target = $region17
  $region16: #{attention_forward.1} parent=0 // pred_region
    _
  $region17: #{attention_forward.1} parent=0 // pred_fallthru
    _
  // Predicated region
  $region18: #{attention_forward.1} parent=0 // pred_check
    _
  $region19: #{attention_forward.1} parent=0 // pred_check_branch
    %1321 = sbr.rel (0) target = $region21
  $region20: #{attention_forward.1} parent=0 // pred_region
    _
  $region21: #{attention_forward.1} parent=0 // pred_fallthru
    _
  // Predicated region
  $region22: #{attention_forward.1} parent=0 // pred_check
    _
  $region23: #{attention_forward.1} parent=0 // pred_check_branch
    %1323 = sbr.rel (0) target = $region25
  $region24: #{attention_forward.1} parent=0 // pred_region
    _
  $region25: #{attention_forward.1} parent=0 // pred_fallthru
    _
  // Predicated region
  $region26: #{attention_forward.1} parent=0 // pred_check
    _
  $region27: #{attention_forward.1} parent=0 // pred_check_branch
    %1325 = sbr.rel (0) target = $region29
  $region28: #{attention_forward.1} parent=0 // pred_region
    _
  $region29: #{attention_forward.1} parent=0 // pred_fallthru
    _

</llo_original>
